<compile_context>
chip_gen: v7x
topology: tpu7x:2x2x1
jax: 0.10.0
libtpu: 0.0.40
codegen_flags: <defaults>
</compile_context>

<pallas_src>
import functools

import jax
import jax.numpy as jnp
from jax import lax
from jax.experimental import pallas as pl
from jax.experimental.pallas import tpu as pltpu

# --- module hyper-params (args.timesteps, args.units) ---
T = 8
U = 32
IN_DIM = T * 21          # 168
HID = T * U              # 256
OUT_DIM = 7
OUT_PAD = 128            # fc3 weight padded to 128 lanes (VMEM only)
EPS = 1e-5               # nn.BatchNorm1d default eps

# TODO(synk): `act` is undefined in the reference module; ReLU is assumed.


def linear_net2b_kernel(x_ref,
                        w1_ref, b1_ref,
                        w2_ref, b2_ref,
                        w3_ref, b3_ref,
                        out_ref):
    # BN is pre-folded into w/b; dropout is identity in eval mode.
    mm_dtype = w1_ref.dtype
    h = jnp.dot(x_ref[...], w1_ref[...], preferred_element_type=jnp.float32)
    h = jnp.maximum(h + b1_ref[...], 0.0)                       # f32 epilogue
    h = jnp.dot(h.astype(mm_dtype), w2_ref[...],
                preferred_element_type=jnp.float32)
    h = jnp.maximum(h + b2_ref[...], 0.0)
    o = jnp.dot(h.astype(mm_dtype), w3_ref[...],
                preferred_element_type=jnp.float32)              # (BM, 128)
    # keep only the 7 real fc3 columns -> unpadded HBM output stream
    out_ref[...] = (o[:, :OUT_DIM] + b3_ref[...]).astype(out_ref.dtype)


def _fold_bn(w, b, gamma, beta, mean, var):
    # y = gamma*(xW+b - mean)*rsqrt(var+eps) + beta == x(W*s) + ((b-mean)*s + beta)
    s = gamma * lax.rsqrt(var + EPS)                 # (1, HID)
    return w * s, (b - mean) * s + beta


def _round_up(n, m):
    return (n + m - 1) // m * m


def _choose_bm(batch):
    # Big tiles amortize the ~0.35 us per-step cost; keep >= 2 grid steps so
    # both v7x TensorCores get work (extra step is noise on 1-TC v5e/v6e).
    for bm in (2048, 1024, 512, 256, 128):
        if batch >= 2 * bm:
            return bm
    # tiny batch: one 16-row-aligned tile (bf16 native sublane packing)
    return _round_up(max(batch, 16), 16)


@functools.partial(jax.jit, static_argnames=("matmul_dtype",))
def linear_net2b(x, params, matmul_dtype=jnp.bfloat16):
    (w1, b1, g1, be1, m1, v1,
     w2, b2, g2, be2, m2, v2,
     w3, b3) = params

    # Host-side BN folding + lane-dense fc3 weight padding (weights only).
    w1f, b1f = _fold_bn(w1, b1, g1, be1, m1, v1)
    w2f, b2f = _fold_bn(w2, b2, g2, be2, m2, v2)
    w3p = jnp.zeros((HID, OUT_PAD), jnp.float32).at[:, :OUT_DIM].set(w3)

    mm = matmul_dtype
    kparams = (w1f.astype(mm), b1f,          # biases stay f32 (VPU epilogue)
               w2f.astype(mm), b2f,
               w3p.astype(mm), b3)           # b3 unpadded (1, 7)

    B = x.shape[0]
    xf = x.reshape(B, IN_DIM).astype(mm)     # == torch x.view(-1, t*21)

    BM = _choose_bm(B)
    grid = pl.cdiv(B, BM)
    Bp = B
    if grid == 1 and BM != B:
        # tiny/ragged single-tile batch: pad up to one aligned tile (cheap)
        Bp = BM
        xf = jnp.pad(xf, ((0, BM - B), (0, 0)))
    # grid > 1: no host pad; the partial last block's OOB rows are dropped.

    def rep(p):
        # replicated parameter block: full array, same block every grid step
        return pl.BlockSpec(p.shape, lambda i: (0, 0))

    out = pl.pallas_call(
        linear_net2b_kernel,
        out_shape=jax.ShapeDtypeStruct((Bp, OUT_DIM), jnp.float32),
        grid_spec=pltpu.PrefetchScalarGridSpec(
            num_scalar_prefetch=0,
            grid=(grid,),
            in_specs=[pl.BlockSpec((BM, IN_DIM), lambda i: (i, 0))]
                     + [rep(p) for p in kparams],
            out_specs=pl.BlockSpec((BM, OUT_DIM), lambda i: (i, 0)),
        ),
        compiler_params=pltpu.CompilerParams(
            dimension_semantics=("parallel",),
            vmem_limit_bytes=32 * 1024 * 1024),   # raise v5e's 16 MiB default
    )(xf, *kparams)

    return out[:B] if Bp != B else out


def linear_net2b_ref(x, params):
    # Pure-JAX eval-mode reference (unfolded BN), for correctness checking.
    (w1, b1, g1, be1, m1, v1,
     w2, b2, g2, be2, m2, v2,
     w3, b3) = params
    h = x.reshape(x.shape[0], IN_DIM)
    h = h @ w1 + b1
    h = (h - m1) * g1 * lax.rsqrt(v1 + EPS) + be1
    h = jnp.maximum(h, 0.0)
    h = h @ w2 + b2
    h = (h - m2) * g2 * lax.rsqrt(v2 + EPS) + be2
    h = jnp.maximum(h, 0.0)
    return h @ w3 + b3


def init_params(key):
    ks = jax.random.split(key, 12)
    f32 = jnp.float32

    def lin(k, fan_in, fan_out):
        bound = 1.0 / jnp.sqrt(fan_in)
        kw, kb = jax.random.split(k)
        w = jax.random.uniform(kw, (fan_in, fan_out), f32, -bound, bound)
        b = jax.random.uniform(kb, (1, fan_out), f32, -bound, bound)
        return w, b

    w1, b1 = lin(ks[0], IN_DIM, HID)
    w2, b2 = lin(ks[1], HID, HID)
    w3, b3 = lin(ks[2], HID, OUT_DIM)

    # BatchNorm1d affine params + running stats.
    g1 = 1.0 + 0.1 * jax.random.normal(ks[3], (1, HID), f32)
    be1 = 0.1 * jax.random.normal(ks[4], (1, HID), f32)
    m1 = 0.05 * jax.random.normal(ks[5], (1, HID), f32)
    v1 = 1.0 + 0.1 * jax.random.uniform(ks[6], (1, HID), f32)

    g2 = 1.0 + 0.1 * jax.random.normal(ks[7], (1, HID), f32)
    be2 = 0.1 * jax.random.normal(ks[8], (1, HID), f32)
    m2 = 0.05 * jax.random.normal(ks[9], (1, HID), f32)
    v2 = 1.0 + 0.1 * jax.random.uniform(ks[10], (1, HID), f32)

    return (w1, b1, g1, be1, m1, v1,
            w2, b2, g2, be2, m2, v2,
            w3, b3)


if __name__ == "__main__":
    key = jax.random.PRNGKey(0)
    kx, kx2, kp = jax.random.split(key, 3)
    params = init_params(kp)

    # --- small batch (single aligned tile) ---
    B = 16
    x = jax.random.normal(kx, (B, T, 21), jnp.float32)
    ref = linear_net2b_ref(x, params)

    # f32 matmul path: tight check vs. the unfolded pure-JAX reference.
    out_f32 = jax.block_until_ready(
        linear_net2b(x, params, matmul_dtype=jnp.float32))
    assert out_f32.shape == (B, OUT_DIM) and out_f32.dtype == jnp.float32
    assert jnp.allclose(out_f32, ref, rtol=1e-3, atol=1e-3)

    # Default perf path: bf16 matmul operands, f32 accumulation/epilogue.
    out = jax.block_until_ready(linear_net2b(x, params))
    assert out.shape == (B, OUT_DIM) and out.dtype == jnp.float32
    assert jnp.allclose(out, ref, rtol=1e-1, atol=1e-1)

    # --- ragged multi-tile batch (exercises cdiv grid + partial last block) ---
    B2 = 300
    x2 = jax.random.normal(kx2, (B2, T, 21), jnp.float32)
    ref2 = linear_net2b_ref(x2, params)
    out2 = jax.block_until_ready(linear_net2b(x2, params))
    assert out2.shape == (B2, OUT_DIM) and out2.dtype == jnp.float32
    assert jnp.allclose(out2, ref2, rtol=1e-1, atol=1e-1)

    print("KERNEL_OK")
</pallas_src>

<mosaic_0001>
module attributes {stable_mosaic.version = 11 : i64} {
  func.func @linear_net2b_kernel(%arg0: i32, %arg1: memref<16x168xf32, #tpu.memory_space<vmem>>, %arg2: memref<168x256xf32, #tpu.memory_space<vmem>>, %arg3: memref<1x256xf32, #tpu.memory_space<vmem>>, %arg4: memref<256x256xf32, #tpu.memory_space<vmem>>, %arg5: memref<1x256xf32, #tpu.memory_space<vmem>>, %arg6: memref<256x128xf32, #tpu.memory_space<vmem>>, %arg7: memref<1x7xf32, #tpu.memory_space<vmem>>, %arg8: memref<16x7xf32, #tpu.memory_space<vmem>>) attributes {dimension_semantics = [#tpu.dimension_semantics<parallel>], iteration_bounds = array<i64: 1>, scalar_prefetch = 0 : i64, scratch_operands = 0 : i64, tpu.core_type = #tpu.core_type<tc>, window_params = [{transform_indices = @transform_0, window_bounds = array<i64: 16, 168>}, {pipeline_mode = #tpu.pipeline_mode<synchronous>, transform_indices = @transform_1, window_bounds = array<i64: 168, 256>}, {pipeline_mode = #tpu.pipeline_mode<synchronous>, transform_indices = @transform_2, window_bounds = array<i64: 1, 256>}, {pipeline_mode = #tpu.pipeline_mode<synchronous>, transform_indices = @transform_3, window_bounds = array<i64: 256, 256>}, {pipeline_mode = #tpu.pipeline_mode<synchronous>, transform_indices = @transform_4, window_bounds = array<i64: 1, 256>}, {pipeline_mode = #tpu.pipeline_mode<synchronous>, transform_indices = @transform_5, window_bounds = array<i64: 256, 128>}, {pipeline_mode = #tpu.pipeline_mode<synchronous>, transform_indices = @transform_6, window_bounds = array<i64: 1, 7>}, {transform_indices = @transform_7, window_bounds = array<i64: 16, 7>}]} {
    %c0 = arith.constant 0 : index
    %c0_0 = arith.constant 0 : index
    %0 = vector.load %arg1[%c0, %c0_0] : memref<16x168xf32, #tpu.memory_space<vmem>>, vector<16x168xf32>
    %c0_1 = arith.constant 0 : index
    %c0_2 = arith.constant 0 : index
    %1 = vector.load %arg2[%c0_1, %c0_2] : memref<168x256xf32, #tpu.memory_space<vmem>>, vector<168x256xf32>
    %cst = arith.constant dense<0.000000e+00> : vector<16x256xf32>
    %2 = tpu.matmul %0, %1, %cst {dimension_numbers = #tpu.dot_dimension_numbers<[1], [0], [0], [1], [0, 0, 1, 1], [], []>} : vector<16x168xf32>, vector<168x256xf32>, vector<16x256xf32> -> vector<16x256xf32>
    %c0_3 = arith.constant 0 : index
    %c0_4 = arith.constant 0 : index
    %3 = vector.load %arg3[%c0_3, %c0_4] : memref<1x256xf32, #tpu.memory_space<vmem>>, vector<1x256xf32>
    %4 = vector.broadcast %3 : vector<1x256xf32> to vector<16x256xf32>
    %5 = arith.addf %2, %4 : vector<16x256xf32>
    %cst_5 = arith.constant 0.000000e+00 : f32
    %6 = vector.broadcast %cst_5 : f32 to vector<16x256xf32>
    %7 = arith.maximumf %5, %6 : vector<16x256xf32>
    %c0_6 = arith.constant 0 : index
    %c0_7 = arith.constant 0 : index
    %8 = vector.load %arg4[%c0_6, %c0_7] : memref<256x256xf32, #tpu.memory_space<vmem>>, vector<256x256xf32>
    %cst_8 = arith.constant dense<0.000000e+00> : vector<16x256xf32>
    %9 = tpu.matmul %7, %8, %cst_8 {dimension_numbers = #tpu.dot_dimension_numbers<[1], [0], [0], [1], [0, 0, 1, 1], [], []>} : vector<16x256xf32>, vector<256x256xf32>, vector<16x256xf32> -> vector<16x256xf32>
    %c0_9 = arith.constant 0 : index
    %c0_10 = arith.constant 0 : index
    %10 = vector.load %arg5[%c0_9, %c0_10] : memref<1x256xf32, #tpu.memory_space<vmem>>, vector<1x256xf32>
    %11 = vector.broadcast %10 : vector<1x256xf32> to vector<16x256xf32>
    %12 = arith.addf %9, %11 : vector<16x256xf32>
    %cst_11 = arith.constant 0.000000e+00 : f32
    %13 = vector.broadcast %cst_11 : f32 to vector<16x256xf32>
    %14 = arith.maximumf %12, %13 : vector<16x256xf32>
    %c0_12 = arith.constant 0 : index
    %c0_13 = arith.constant 0 : index
    %15 = vector.load %arg6[%c0_12, %c0_13] : memref<256x128xf32, #tpu.memory_space<vmem>>, vector<256x128xf32>
    %cst_14 = arith.constant dense<0.000000e+00> : vector<16x128xf32>
    %16 = tpu.matmul %14, %15, %cst_14 {dimension_numbers = #tpu.dot_dimension_numbers<[1], [0], [0], [1], [0, 0, 1, 1], [], []>} : vector<16x256xf32>, vector<256x128xf32>, vector<16x128xf32> -> vector<16x128xf32>
    %17 = vector.extract_strided_slice %16 {offsets = [0, 0], sizes = [16, 7], strides = [1, 1]} : vector<16x128xf32> to vector<16x7xf32>
    %c0_15 = arith.constant 0 : index
    %c0_16 = arith.constant 0 : index
    %18 = vector.load %arg7[%c0_15, %c0_16] : memref<1x7xf32, #tpu.memory_space<vmem>>, vector<1x7xf32>
    %19 = vector.broadcast %18 : vector<1x7xf32> to vector<16x7xf32>
    %20 = arith.addf %17, %19 : vector<16x7xf32>
    %c0_17 = arith.constant 0 : index
    %c0_18 = arith.constant 0 : index
    %21 = vector.load %arg8[%c0_17, %c0_18] : memref<16x7xf32, #tpu.memory_space<vmem>>, vector<16x7xf32>
    tpu.vector_store %arg8[%c0_17, %c0_18], %20 {strides = array<i32>} : memref<16x7xf32, #tpu.memory_space<vmem>>, vector<16x7xf32>,
    return
  }
  func.func @transform_0(%arg0: i32) -> (i32, i32) {
    %c0_i32 = arith.constant 0 : i32
    %c0_i32_0 = arith.constant 0 : i32
    return %arg0, %c0_i32 : i32, i32
  }
  func.func @transform_1(%arg0: i32) -> (i32, i32) {
    %c0_i32 = arith.constant 0 : i32
    %c0_i32_0 = arith.constant 0 : i32
    %c0_i32_1 = arith.constant 0 : i32
    return %c0_i32, %c0_i32_0 : i32, i32
  }
  func.func @transform_2(%arg0: i32) -> (i32, i32) {
    %c0_i32 = arith.constant 0 : i32
    %c0_i32_0 = arith.constant 0 : i32
    %c0_i32_1 = arith.constant 0 : i32
    return %c0_i32, %c0_i32_0 : i32, i32
  }
  func.func @transform_3(%arg0: i32) -> (i32, i32) {
    %c0_i32 = arith.constant 0 : i32
    %c0_i32_0 = arith.constant 0 : i32
    %c0_i32_1 = arith.constant 0 : i32
    return %c0_i32, %c0_i32_0 : i32, i32
  }
  func.func @transform_4(%arg0: i32) -> (i32, i32) {
    %c0_i32 = arith.constant 0 : i32
    %c0_i32_0 = arith.constant 0 : i32
    %c0_i32_1 = arith.constant 0 : i32
    return %c0_i32, %c0_i32_0 : i32, i32
  }
  func.func @transform_5(%arg0: i32) -> (i32, i32) {
    %c0_i32 = arith.constant 0 : i32
    %c0_i32_0 = arith.constant 0 : i32
    %c0_i32_1 = arith.constant 0 : i32
    return %c0_i32, %c0_i32_0 : i32, i32
  }
  func.func @transform_6(%arg0: i32) -> (i32, i32) {
    %c0_i32 = arith.constant 0 : i32
    %c0_i32_0 = arith.constant 0 : i32
    %c0_i32_1 = arith.constant 0 : i32
    return %c0_i32, %c0_i32_0 : i32, i32
  }
  func.func @transform_7(%arg0: i32) -> (i32, i32) {
    %c0_i32 = arith.constant 0 : i32
    %c0_i32_0 = arith.constant 0 : i32
    return %arg0, %c0_i32 : i32, i32
  }
}

</mosaic_0001>

<llo_original>
// kernel: linear_net2b.1
$region0: #{linear_net2b.1}
  #allocation0 [shape = 'u32[]', space=smem, size = 0x4, offset = 0x4, fixed_abs, tag = 'smem constant byte address 0x4 - core index']
  #allocation1 [shape = 'u32[144,128]{1,0:T(1,128)}', space=vmem, size = 0x12000, scoped, tag = 'internal scratch']
  %s0 = inlined_call_operand.vmem [shape: f32[16,168], index: 0, kind: input, shape index: {}]
  %s1 = inlined_call_operand.vmem [shape: f32[168,256], index: 1, kind: input, shape index: {}]
  %s2 = inlined_call_operand.vmem [shape: f32[1,256], index: 2, kind: input, shape index: {}]
  %s3 = inlined_call_operand.vmem [shape: f32[256,256], index: 3, kind: input, shape index: {}]
  %s4 = inlined_call_operand.vmem [shape: f32[1,256], index: 4, kind: input, shape index: {}]
  %s5 = inlined_call_operand.vmem [shape: f32[256,128], index: 5, kind: input, shape index: {}]
  %s6 = inlined_call_operand.vmem [shape: f32[1,7], index: 6, kind: input, shape index: {}]
  %s7 = inlined_call_operand.vmem [shape: f32[16,7], index: 7, kind: output, shape index: {}]
  %s8 = sld [smem:[#allocation0]]
  $region38: #{linear_net2b.1} parent=0
    _
  %s10 = ssub.s32 1, %s8
  %s11 = scalar_select 0, %s10, %s8
  // Predicated region
  $region2: #{linear_net2b.1} parent=0 // pred_check
    _
  $region3: #{linear_net2b.1} parent=0 // pred_check_branch
    %13 = sbr.rel (0) target = $region5
  $region4: #{linear_net2b.1} parent=0 // pred_region
    _
  $region5: #{linear_net2b.1} parent=0 // pred_fallthru
    _
  // Predicated region
  $region6: #{linear_net2b.1} parent=0 // pred_check
    _
  $region7: #{linear_net2b.1} parent=0 // pred_check_branch
    %15 = sbr.rel (0) target = $region9
  $region8: #{linear_net2b.1} parent=0 // pred_region
    _
  $region9: #{linear_net2b.1} parent=0 // pred_fallthru
    _
  // Predicated region
  $region10: #{linear_net2b.1} parent=0 // pred_check
    _
  $region11: #{linear_net2b.1} parent=0 // pred_check_branch
    %17 = sbr.rel (0) target = $region13
  $region12: #{linear_net2b.1} parent=0 // pred_region
    _
  $region13: #{linear_net2b.1} parent=0 // pred_fallthru
    _
  // Predicated region
  $region14: #{linear_net2b.1} parent=0 // pred_check
    _
  $region15: #{linear_net2b.1} parent=0 // pred_check_branch
    %19 = sbr.rel (0) target = $region17
  $region16: #{linear_net2b.1} parent=0 // pred_region
    _
  $region17: #{linear_net2b.1} parent=0 // pred_fallthru
    _
  // Predicated region
  $region18: #{linear_net2b.1} parent=0 // pred_check
    _
  $region19: #{linear_net2b.1} parent=0 // pred_check_branch
    %21 = sbr.rel (0) target = $region21
  $region20: #{linear_net2b.1} parent=0 // pred_region
    _
  $region21: #{linear_net2b.1} parent=0 // pred_fallthru
    _
  // Predicated region
  $region22: #{linear_net2b.1} parent=0 // pred_check
    _
  $region23: #{linear_net2b.1} parent=0 // pred_check_branch
    %23 = sbr.rel (0) target = $region25
  $region24: #{linear_net2b.1} parent=0 // pred_region
    _
  $region25: #{linear_net2b.1} parent=0 // pred_fallthru
    _
  // Predicated region
  $region26: #{linear_net2b.1} parent=0 // pred_check
    _
  $region27: #{linear_net2b.1} parent=0 // pred_check_branch
    %25 = sbr.rel (0) target = $region29
  $region28: #{linear_net2b.1} parent=0 // pred_region
    _
  $region29: #{linear_net2b.1} parent=0 // pred_fallthru
    _
  %v26 = vld [vmem:[%s0] sm:$0xff]
  %v27 = vld [vmem:[%s0 + $0x8] sm:$0xff]
  %v28 = vld [vmem:[%s0 + $0x10] sm:$0xff]
  %v29 = vld [vmem:[%s0 + $0x18] sm:$0xff]
  %v30 = vld [vmem:[%s1] sm:$0xff]
  %v31 = vld [vmem:[%s1 + $0x8] sm:$0xff]
  %v32 = vld [vmem:[%s1 + $0x10] sm:$0xff]
  %v33 = vld [vmem:[%s1 + $0x18] sm:$0xff]
  %v34 = vld [vmem:[%s1 + $0x20] sm:$0xff]
  %v35 = vld [vmem:[%s1 + $0x28] sm:$0xff]
  %v36 = vld [vmem:[%s1 + $0x30] sm:$0xff]
  %v37 = vld [vmem:[%s1 + $0x38] sm:$0xff]
  %v38 = vld [vmem:[%s1 + $0x40] sm:$0xff]
  %v39 = vld [vmem:[%s1 + $0x48] sm:$0xff]
  %v40 = vld [vmem:[%s1 + $0x50] sm:$0xff]
  %v41 = vld [vmem:[%s1 + $0x58] sm:$0xff]
  %v42 = vld [vmem:[%s1 + $0x60] sm:$0xff]
  %v43 = vld [vmem:[%s1 + $0x68] sm:$0xff]
  %v44 = vld [vmem:[%s1 + $0x70] sm:$0xff]
  %v45 = vld [vmem:[%s1 + $0x78] sm:$0xff]
  %v46 = vld [vmem:[%s1 + $0x80] sm:$0xff]
  %v47 = vld [vmem:[%s1 + $0x88] sm:$0xff]
  %v48 = vld [vmem:[%s1 + $0x90] sm:$0xff]
  %v49 = vld [vmem:[%s1 + $0x98] sm:$0xff]
  %v50 = vld [vmem:[%s1 + $0xa0] sm:$0xff]
  %v51 = vld [vmem:[%s1 + $0xa8] sm:$0xff]
  %v52 = vld [vmem:[%s1 + $0xb0] sm:$0xff]
  %v53 = vld [vmem:[%s1 + $0xb8] sm:$0xff]
  %v54 = vld [vmem:[%s1 + $0xc0] sm:$0xff]
  %v55 = vld [vmem:[%s1 + $0xc8] sm:$0xff]
  %v56 = vld [vmem:[%s1 + $0xd0] sm:$0xff]
  %v57 = vld [vmem:[%s1 + $0xd8] sm:$0xff]
  %v58 = vld [vmem:[%s1 + $0xe0] sm:$0xff]
  %v59 = vld [vmem:[%s1 + $0xe8] sm:$0xff]
  %v60 = vld [vmem:[%s1 + $0xf0] sm:$0xff]
  %v61 = vld [vmem:[%s1 + $0xf8] sm:$0xff]
  %v62 = vld [vmem:[%s1 + $0x100] sm:$0xff]
  %v63 = vld [vmem:[%s1 + $0x108] sm:$0xff]
  %v64 = vld [vmem:[%s1 + $0x110] sm:$0xff]
  %v65 = vld [vmem:[%s1 + $0x118] sm:$0xff]
  %v66 = vld [vmem:[%s1 + $0x120] sm:$0xff]
  %v67 = vld [vmem:[%s1 + $0x128] sm:$0xff]
  %v68 = vld [vmem:[%s1 + $0x130] sm:$0xff]
  %v69 = vld [vmem:[%s1 + $0x138] sm:$0xff]
  %v70 = vld [vmem:[%s1 + $0x140] sm:$0xff]
  %v71 = vld [vmem:[%s1 + $0x148] sm:$0xff]
  %v72 = vld [vmem:[%s2] sm:$0x3]
  %v74 = vlaneseq
  %v75 = vshrl.u32 %v74, 7
  %v76 = vsub.s32 0, %v75
  %v77 = vrot.slane %v72, %v76
  %v78 = vlaneseq
  %v79 = vshrl.u32 %v78, 7
  %v80 = vsub.s32 1, %v79
  %v81 = vrot.slane %v72, %v80
  %vm84 = vcmask 326656
  %v86 = vsel %vm84, %v27, 0
  %v89 = vsel %vm84, %v29, 0
  %91 = vmatprep.subr.mxu0 %v31
  %92 = vmatpush1.msra.mxu0 %v30
  %93 = vmatprep.subr.mxu0 %v33
  %94 = vmatpush1.msra.mxu0 %v32
  %95 = vmatprep.subr.mxu0 %v35
  %96 = vmatpush1.msra.mxu0 %v34
  %97 = vmatprep.subr.mxu0 %v37
  %98 = vmatpush1.msra.mxu0 %v36
  %99 = vmatprep.subr.mxu0 %v39
  %100 = vmatpush1.msra.mxu0 %v38
  %101 = vmatprep.subr.mxu0 %v41
  %102 = vmatpush1.msra.mxu0 %v40
  %103 = vmatprep.subr.mxu0 %v43
  %104 = vmatpush1.msra.mxu0 %v42
  %105 = vmatprep.subr.mxu0 %v45
  %106 = vmatpush1.msra.mxu0 %v44
  %107 = vmatprep.subr.mxu0 %v47
  %108 = vmatpush1.msra.mxu0 %v46
  %109 = vmatprep.subr.mxu0 %v49
  %110 = vmatpush1.msra.mxu0 %v48
  %111 = vmatprep.subr.mxu0 %v51
  %112 = vmatpush1.msra.mxu0 %v50
  %113 = vmatprep.subr.mxu0 %v53
  %114 = vmatpush1.msra.mxu0 %v52
  %115 = vmatprep.subr.mxu0 %v55
  %116 = vmatpush1.msra.mxu0 %v54
  %117 = vmatprep.subr.mxu0 %v57
  %118 = vmatpush1.msra.mxu0 %v56
  %119 = vmatprep.subr.mxu0 %v59
  %120 = vmatpush1.msra.mxu0 %v58
  %121 = vmatprep.subr.mxu0 %v61
  %122 = vmatpush1.msra.mxu0 %v60
  %123 = vmatprep.subr.mxu0 %v63
  %124 = vmatpush1.msra.mxu0 %v62
  %125 = vmatprep.subr.mxu0 %v65
  %126 = vmatpush1.msra.mxu0 %v64
  %127 = vmatprep.subr.mxu0 %v67
  %128 = vmatpush1.msra.mxu0 %v66
  %129 = vmatprep.subr.mxu0 %v69
  %130 = vmatpush1.msra.mxu0 %v68
  %131 = vmatprep.subr.mxu0 %v71
  %132 = vmatpush1.msra.mxu0 %v70
  %133 = vmatprep.subr.mxu0 0.0
  %134 = vmatpush1.msra.mxu0 0.0
  %135 = vmatprep.subr.mxu0 0.0
  %136 = vmatpush1.msra.mxu0 0.0
  %137 = vmatprep.subr.mxu0 0.0
  %138 = vmatpush1.msra.mxu0 0.0
  %139 = vmatprep.subr.mxu0 0.0
  %140 = vmatpush1.msra.mxu0 0.0
  %141 = vmatprep.subr.mxu0 0.0
  %142 = vmatpush1.msra.mxu0 0.0
  %143 = vmatprep.subr.mxu0 0.0
  %144 = vmatpush1.msra.mxu0 0.0
  %145 = vmatprep.subr.mxu0 0.0
  %146 = vmatpush1.msra.mxu0 0.0
  %147 = vmatprep.subr.mxu0 0.0
  %148 = vmatpush1.msra.mxu0 0.0
  %149 = vmatprep.subr.mxu0 0.0
  %150 = vmatpush1.msra.mxu0 0.0
  %151 = vmatprep.subr.mxu0 0.0
  %152 = vmatpush1.msra.mxu0 0.0
  %153 = vmatprep.subr.mxu0 0.0
  %154 = vmatpush1.msra.mxu0 0.0
  %155 = vmatprep.mubr.f32.mxu0 %v86
  %156 = vmatmul.mubr.f32.gmra.mrb[0].mxu0 %v26
  %v157 = vpop.f32.mrb[0].mxu0
  %v158 = vadd.f32 %v77, %v157
  %v159 = vpop.f32.mrb[0].mxu0
  %v160 = vadd.f32 %v81, %v159
  %161 = vmatprep.mubr.f32.mxu0 %v89
  %162 = vmatmul.mubr.f32.gmra.mrb[0].mxu0 %v28
  %v163 = vpop.f32.mrb[0].mxu0
  %v164 = vadd.f32 %v77, %v163
  %v165 = vpop.f32.mrb[0].mxu0
  %v166 = vadd.f32 %v81, %v165
  %167 = vdwg.mxu0
  %v168 = vmax.f32 %v158, 0.0
  %v169 = vmax.f32 %v160, 0.0
  %v170 = vmax.f32 %v164, 0.0
  %v171 = vmax.f32 %v166, 0.0
  %v172 = vld [vmem:[%s3] sm:$0xff]
  %v173 = vld [vmem:[%s3 + $0x8] sm:$0xff]
  %v174 = vld [vmem:[%s3 + $0x10] sm:$0xff]
  %v175 = vld [vmem:[%s3 + $0x18] sm:$0xff]
  %v176 = vld [vmem:[%s3 + $0x20] sm:$0xff]
  %v177 = vld [vmem:[%s3 + $0x28] sm:$0xff]
  %v178 = vld [vmem:[%s3 + $0x30] sm:$0xff]
  %v179 = vld [vmem:[%s3 + $0x38] sm:$0xff]
  %v180 = vld [vmem:[%s3 + $0x40] sm:$0xff]
  %v181 = vld [vmem:[%s3 + $0x48] sm:$0xff]
  %v182 = vld [vmem:[%s3 + $0x50] sm:$0xff]
  %v183 = vld [vmem:[%s3 + $0x58] sm:$0xff]
  %v184 = vld [vmem:[%s3 + $0x60] sm:$0xff]
  %v185 = vld [vmem:[%s3 + $0x68] sm:$0xff]
  %v186 = vld [vmem:[%s3 + $0x70] sm:$0xff]
  %v187 = vld [vmem:[%s3 + $0x78] sm:$0xff]
  %v188 = vld [vmem:[%s3 + $0x80] sm:$0xff]
  %v189 = vld [vmem:[%s3 + $0x88] sm:$0xff]
  %v190 = vld [vmem:[%s3 + $0x90] sm:$0xff]
  %v191 = vld [vmem:[%s3 + $0x98] sm:$0xff]
  %v192 = vld [vmem:[%s3 + $0xa0] sm:$0xff]
  %v193 = vld [vmem:[%s3 + $0xa8] sm:$0xff]
  %v194 = vld [vmem:[%s3 + $0xb0] sm:$0xff]
  %v195 = vld [vmem:[%s3 + $0xb8] sm:$0xff]
  %v196 = vld [vmem:[%s3 + $0xc0] sm:$0xff]
  %v197 = vld [vmem:[%s3 + $0xc8] sm:$0xff]
  %v198 = vld [vmem:[%s3 + $0xd0] sm:$0xff]
  %v199 = vld [vmem:[%s3 + $0xd8] sm:$0xff]
  %v200 = vld [vmem:[%s3 + $0xe0] sm:$0xff]
  %v201 = vld [vmem:[%s3 + $0xe8] sm:$0xff]
  %v202 = vld [vmem:[%s3 + $0xf0] sm:$0xff]
  %v203 = vld [vmem:[%s3 + $0xf8] sm:$0xff]
  %v204 = vld [vmem:[%s3 + $0x100] sm:$0xff]
  %v205 = vld [vmem:[%s3 + $0x108] sm:$0xff]
  %v206 = vld [vmem:[%s3 + $0x110] sm:$0xff]
  %v207 = vld [vmem:[%s3 + $0x118] sm:$0xff]
  %v208 = vld [vmem:[%s3 + $0x120] sm:$0xff]
  %v209 = vld [vmem:[%s3 + $0x128] sm:$0xff]
  %v210 = vld [vmem:[%s3 + $0x130] sm:$0xff]
  %v211 = vld [vmem:[%s3 + $0x138] sm:$0xff]
  %v212 = vld [vmem:[%s3 + $0x140] sm:$0xff]
  %v213 = vld [vmem:[%s3 + $0x148] sm:$0xff]
  %v214 = vld [vmem:[%s3 + $0x150] sm:$0xff]
  %v215 = vld [vmem:[%s3 + $0x158] sm:$0xff]
  %v216 = vld [vmem:[%s3 + $0x160] sm:$0xff]
  %v217 = vld [vmem:[%s3 + $0x168] sm:$0xff]
  %v218 = vld [vmem:[%s3 + $0x170] sm:$0xff]
  %v219 = vld [vmem:[%s3 + $0x178] sm:$0xff]
  %v220 = vld [vmem:[%s3 + $0x180] sm:$0xff]
  %v221 = vld [vmem:[%s3 + $0x188] sm:$0xff]
  %v222 = vld [vmem:[%s3 + $0x190] sm:$0xff]
  %v223 = vld [vmem:[%s3 + $0x198] sm:$0xff]
  %v224 = vld [vmem:[%s3 + $0x1a0] sm:$0xff]
  %v225 = vld [vmem:[%s3 + $0x1a8] sm:$0xff]
  %v226 = vld [vmem:[%s3 + $0x1b0] sm:$0xff]
  %v227 = vld [vmem:[%s3 + $0x1b8] sm:$0xff]
  %v228 = vld [vmem:[%s3 + $0x1c0] sm:$0xff]
  %v229 = vld [vmem:[%s3 + $0x1c8] sm:$0xff]
  %v230 = vld [vmem:[%s3 + $0x1d0] sm:$0xff]
  %v231 = vld [vmem:[%s3 + $0x1d8] sm:$0xff]
  %v232 = vld [vmem:[%s3 + $0x1e0] sm:$0xff]
  %v233 = vld [vmem:[%s3 + $0x1e8] sm:$0xff]
  %v234 = vld [vmem:[%s3 + $0x1f0] sm:$0xff]
  %v235 = vld [vmem:[%s3 + $0x1f8] sm:$0xff]
  %v236 = vld [vmem:[%s4] sm:$0x3]
  %v238 = vlaneseq
  %v239 = vshrl.u32 %v238, 7
  %v240 = vsub.s32 0, %v239
  %v241 = vrot.slane %v236, %v240
  %v242 = vlaneseq
  %v243 = vshrl.u32 %v242, 7
  %v244 = vsub.s32 1, %v243
  %v245 = vrot.slane %v236, %v244
  %248 = vmatprep.subr.mxu0 %v173
  %249 = vmatpush1.msra.mxu0 %v172
  %250 = vmatprep.subr.mxu0 %v175
  %251 = vmatpush1.msra.mxu0 %v174
  %252 = vmatprep.subr.mxu0 %v177
  %253 = vmatpush1.msra.mxu0 %v176
  %254 = vmatprep.subr.mxu0 %v179
  %255 = vmatpush1.msra.mxu0 %v178
  %256 = vmatprep.subr.mxu0 %v181
  %257 = vmatpush1.msra.mxu0 %v180
  %258 = vmatprep.subr.mxu0 %v183
  %259 = vmatpush1.msra.mxu0 %v182
  %260 = vmatprep.subr.mxu0 %v185
  %261 = vmatpush1.msra.mxu0 %v184
  %262 = vmatprep.subr.mxu0 %v187
  %263 = vmatpush1.msra.mxu0 %v186
  %264 = vmatprep.subr.mxu0 %v189
  %265 = vmatpush1.msra.mxu0 %v188
  %266 = vmatprep.subr.mxu0 %v191
  %267 = vmatpush1.msra.mxu0 %v190
  %268 = vmatprep.subr.mxu0 %v193
  %269 = vmatpush1.msra.mxu0 %v192
  %270 = vmatprep.subr.mxu0 %v195
  %271 = vmatpush1.msra.mxu0 %v194
  %272 = vmatprep.subr.mxu0 %v197
  %273 = vmatpush1.msra.mxu0 %v196
  %274 = vmatprep.subr.mxu0 %v199
  %275 = vmatpush1.msra.mxu0 %v198
  %276 = vmatprep.subr.mxu0 %v201
  %277 = vmatpush1.msra.mxu0 %v200
  %278 = vmatprep.subr.mxu0 %v203
  %279 = vmatpush1.msra.mxu0 %v202
  %280 = vmatprep.subr.mxu0 %v205
  %281 = vmatpush1.msra.mxu0 %v204
  %282 = vmatprep.subr.mxu0 %v207
  %283 = vmatpush1.msra.mxu0 %v206
  %284 = vmatprep.subr.mxu0 %v209
  %285 = vmatpush1.msra.mxu0 %v208
  %286 = vmatprep.subr.mxu0 %v211
  %287 = vmatpush1.msra.mxu0 %v210
  %288 = vmatprep.subr.mxu0 %v213
  %289 = vmatpush1.msra.mxu0 %v212
  %290 = vmatprep.subr.mxu0 %v215
  %291 = vmatpush1.msra.mxu0 %v214
  %292 = vmatprep.subr.mxu0 %v217
  %293 = vmatpush1.msra.mxu0 %v216
  %294 = vmatprep.subr.mxu0 %v219
  %295 = vmatpush1.msra.mxu0 %v218
  %296 = vmatprep.subr.mxu0 %v221
  %297 = vmatpush1.msra.mxu0 %v220
  %298 = vmatprep.subr.mxu0 %v223
  %299 = vmatpush1.msra.mxu0 %v222
  %300 = vmatprep.subr.mxu0 %v225
  %301 = vmatpush1.msra.mxu0 %v224
  %302 = vmatprep.subr.mxu0 %v227
  %303 = vmatpush1.msra.mxu0 %v226
  %304 = vmatprep.subr.mxu0 %v229
  %305 = vmatpush1.msra.mxu0 %v228
  %306 = vmatprep.subr.mxu0 %v231
  %307 = vmatpush1.msra.mxu0 %v230
  %308 = vmatprep.subr.mxu0 %v233
  %309 = vmatpush1.msra.mxu0 %v232
  %310 = vmatprep.subr.mxu0 %v235
  %311 = vmatpush1.msra.mxu0 %v234
  %312 = vmatprep.mubr.f32.mxu0 %v169
  %313 = vmatmul.mubr.f32.gmra.mrb[0].mxu0 %v168
  %v314 = vpop.f32.mrb[0].mxu0
  %v315 = vadd.f32 %v241, %v314
  %v316 = vpop.f32.mrb[0].mxu0
  %v317 = vadd.f32 %v245, %v316
  %318 = vmatprep.mubr.f32.mxu0 %v171
  %319 = vmatmul.mubr.f32.gmra.mrb[0].mxu0 %v170
  %v320 = vpop.f32.mrb[0].mxu0
  %v321 = vadd.f32 %v241, %v320
  %v322 = vpop.f32.mrb[0].mxu0
  %v323 = vadd.f32 %v245, %v322
  %324 = vdwg.mxu0
  %v325 = vmax.f32 %v315, 0.0
  %v326 = vmax.f32 %v317, 0.0
  %v327 = vmax.f32 %v321, 0.0
  %v328 = vmax.f32 %v323, 0.0
  %v329 = vld [vmem:[%s5] sm:$0xff]
  %v330 = vld [vmem:[%s5 + $0x8] sm:$0xff]
  %v331 = vld [vmem:[%s5 + $0x10] sm:$0xff]
  %v332 = vld [vmem:[%s5 + $0x18] sm:$0xff]
  %v333 = vld [vmem:[%s5 + $0x20] sm:$0xff]
  %v334 = vld [vmem:[%s5 + $0x28] sm:$0xff]
  %v335 = vld [vmem:[%s5 + $0x30] sm:$0xff]
  %v336 = vld [vmem:[%s5 + $0x38] sm:$0xff]
  %v337 = vld [vmem:[%s5 + $0x40] sm:$0xff]
  %v338 = vld [vmem:[%s5 + $0x48] sm:$0xff]
  %v339 = vld [vmem:[%s5 + $0x50] sm:$0xff]
  %v340 = vld [vmem:[%s5 + $0x58] sm:$0xff]
  %v341 = vld [vmem:[%s5 + $0x60] sm:$0xff]
  %v342 = vld [vmem:[%s5 + $0x68] sm:$0xff]
  %v343 = vld [vmem:[%s5 + $0x70] sm:$0xff]
  %v344 = vld [vmem:[%s5 + $0x78] sm:$0xff]
  %v345 = vld [vmem:[%s5 + $0x80] sm:$0xff]
  %v346 = vld [vmem:[%s5 + $0x88] sm:$0xff]
  %v347 = vld [vmem:[%s5 + $0x90] sm:$0xff]
  %v348 = vld [vmem:[%s5 + $0x98] sm:$0xff]
  %v349 = vld [vmem:[%s5 + $0xa0] sm:$0xff]
  %v350 = vld [vmem:[%s5 + $0xa8] sm:$0xff]
  %v351 = vld [vmem:[%s5 + $0xb0] sm:$0xff]
  %v352 = vld [vmem:[%s5 + $0xb8] sm:$0xff]
  %v353 = vld [vmem:[%s5 + $0xc0] sm:$0xff]
  %v354 = vld [vmem:[%s5 + $0xc8] sm:$0xff]
  %v355 = vld [vmem:[%s5 + $0xd0] sm:$0xff]
  %v356 = vld [vmem:[%s5 + $0xd8] sm:$0xff]
  %v357 = vld [vmem:[%s5 + $0xe0] sm:$0xff]
  %v358 = vld [vmem:[%s5 + $0xe8] sm:$0xff]
  %v359 = vld [vmem:[%s5 + $0xf0] sm:$0xff]
  %v360 = vld [vmem:[%s5 + $0xf8] sm:$0xff]
  %361 = vmatprep.subr.mxu0 0.0
  %362 = vmatpush1.msra.mxu0 %v329
  %363 = vmatprep.subr.mxu0 0.0
  %364 = vmatpush1.msra.mxu0 %v330
  %365 = vmatprep.subr.mxu0 0.0
  %366 = vmatpush1.msra.mxu0 %v331
  %367 = vmatprep.subr.mxu0 0.0
  %368 = vmatpush1.msra.mxu0 %v332
  %369 = vmatprep.subr.mxu0 0.0
  %370 = vmatpush1.msra.mxu0 %v333
  %371 = vmatprep.subr.mxu0 0.0
  %372 = vmatpush1.msra.mxu0 %v334
  %373 = vmatprep.subr.mxu0 0.0
  %374 = vmatpush1.msra.mxu0 %v335
  %375 = vmatprep.subr.mxu0 0.0
  %376 = vmatpush1.msra.mxu0 %v336
  %377 = vmatprep.subr.mxu0 0.0
  %378 = vmatpush1.msra.mxu0 %v337
  %379 = vmatprep.subr.mxu0 0.0
  %380 = vmatpush1.msra.mxu0 %v338
  %381 = vmatprep.subr.mxu0 0.0
  %382 = vmatpush1.msra.mxu0 %v339
  %383 = vmatprep.subr.mxu0 0.0
  %384 = vmatpush1.msra.mxu0 %v340
  %385 = vmatprep.subr.mxu0 0.0
  %386 = vmatpush1.msra.mxu0 %v341
  %387 = vmatprep.subr.mxu0 0.0
  %388 = vmatpush1.msra.mxu0 %v342
  %389 = vmatprep.subr.mxu0 0.0
  %390 = vmatpush1.msra.mxu0 %v343
  %391 = vmatprep.subr.mxu0 0.0
  %392 = vmatpush1.msra.mxu0 %v344
  %393 = vmatprep.subr.mxu0 0.0
  %394 = vmatpush1.msra.mxu0 %v345
  %395 = vmatprep.subr.mxu0 0.0
  %396 = vmatpush1.msra.mxu0 %v346
  %397 = vmatprep.subr.mxu0 0.0
  %398 = vmatpush1.msra.mxu0 %v347
  %399 = vmatprep.subr.mxu0 0.0
  %400 = vmatpush1.msra.mxu0 %v348
  %401 = vmatprep.subr.mxu0 0.0
  %402 = vmatpush1.msra.mxu0 %v349
  %403 = vmatprep.subr.mxu0 0.0
  %404 = vmatpush1.msra.mxu0 %v350
  %405 = vmatprep.subr.mxu0 0.0
  %406 = vmatpush1.msra.mxu0 %v351
  %407 = vmatprep.subr.mxu0 0.0
  %408 = vmatpush1.msra.mxu0 %v352
  %409 = vmatprep.subr.mxu0 0.0
  %410 = vmatpush1.msra.mxu0 %v353
  %411 = vmatprep.subr.mxu0 0.0
  %412 = vmatpush1.msra.mxu0 %v354
  %413 = vmatprep.subr.mxu0 0.0
  %414 = vmatpush1.msra.mxu0 %v355
  %415 = vmatprep.subr.mxu0 0.0
  %416 = vmatpush1.msra.mxu0 %v356
  %417 = vmatprep.subr.mxu0 0.0
  %418 = vmatpush1.msra.mxu0 %v357
  %419 = vmatprep.subr.mxu0 0.0
  %420 = vmatpush1.msra.mxu0 %v358
  %421 = vmatprep.subr.mxu0 0.0
  %422 = vmatpush1.msra.mxu0 %v359
  %423 = vmatprep.subr.mxu0 0.0
  %424 = vmatpush1.msra.mxu0 %v360
  %425 = vmatprep.mubr.f32.mxu0 %v326
  %426 = vmatmul.mubr.f32.gmra.mrb[0].mxu0 %v325
  %v427 = vpop.f32.mrb[0].mxu0
  %v428 = vadd.f32 0.0, %v427
  %v429 = vpop.f32.mrb[0].mxu0
  %430 = vmatprep.mubr.f32.mxu0 %v328
  %431 = vmatmul.mubr.f32.gmra.mrb[0].mxu0 %v327
  %v432 = vpop.f32.mrb[0].mxu0
  %v433 = vadd.f32 0.0, %v432
  %v434 = vpop.f32.mrb[0].mxu0
  %435 = vdwg.mxu0
  %v436 = vld [vmem:[%s6] sm:$0x1]
  %v438 = vlaneseq
  %v439 = vshrl.u32 %v438, 7
  %v440 = vsub.s32 0, %v439
  %v441 = vrot.slane %v436, %v440
  %v443 = vadd.f32 %v428, %v441
  %v444 = vadd.f32 %v433, %v441
  %vm445 = vcmask 56320
  %446 = vst.msk [vmem:[%s7] sm:$0xff] %vm445, %v443
  %447 = vst.msk [vmem:[%s7 + $0x8] sm:$0xff] %vm445, %v444
  // Predicated region
  $region30: #{linear_net2b.1} parent=0 // pred_check
    _
  $region31: #{linear_net2b.1} parent=0 // pred_check_branch
    %449 = sbr.rel (0) target = $region33
  $region32: #{linear_net2b.1} parent=0 // pred_region
    _
  $region33: #{linear_net2b.1} parent=0 // pred_fallthru
    _
  // Predicated region
  $region34: #{linear_net2b.1} parent=0 // pred_check
    _
  $region35: #{linear_net2b.1} parent=0 // pred_check_branch
    %451 = sbr.rel (0) target = $region37
  $region36: #{linear_net2b.1} parent=0 // pred_region
    _
  $region37: #{linear_net2b.1} parent=0 // pred_fallthru
    _

</llo_original>
